<compile_context>
chip_gen: v7x
topology: tpu7x:2x2x1
jax: 0.10.0
libtpu: 0.0.40
codegen_flags: <defaults>
</compile_context>

<pallas_src>
import functools
import math

import jax
import jax.numpy as jnp
from jax.experimental import pallas as pl
from jax.experimental.pallas import tpu as pltpu

_N_LAYERS = 6
_PAD = 128          # lane-padded feature width for every layer
_IN_FEATURES = 8
_HIDDEN = 50
_OUT_FEATURES = 3


def _mlp_kernel(x_ref, w_ref, b_ref, o_ref):
    """Runs the whole 6-layer MLP on one (TB, 128) activation tile.

    x_ref: (TB, 128) f32        -- input features zero-padded 8 -> 128
    w_ref: (6, 128, 128) bf16   -- per-layer weight slabs (in, out), zero-padded
    b_ref: (6, 1, 128)  f32     -- per-layer bias slabs, zero-padded
    o_ref: (TB, 128) f32        -- output tile; valid columns are [:, :3]
    """
    h = x_ref[...]
    for i in range(_N_LAYERS - 1):
        z = jnp.dot(h.astype(jnp.bfloat16), w_ref[i],
                    preferred_element_type=jnp.float32) + b_ref[i]
        h = jnp.maximum(z, 0.0)
    o_ref[...] = (jnp.dot(h.astype(jnp.bfloat16), w_ref[_N_LAYERS - 1],
                          preferred_element_type=jnp.float32)
                  + b_ref[_N_LAYERS - 1])


@functools.partial(jax.jit, static_argnames=("tb",))
def net_forward(x, w_slab, b_slab, *, tb=128):
    """x: (B, 8) f32; w_slab: (6,128,128) bf16; b_slab: (6,1,128) f32."""
    B = x.shape[0]
    n_tiles = pl.cdiv(B, tb)
    bp = n_tiles * tb

    # Host-side batch + feature padding so every tile is (8,128)-aligned.
    xp = jnp.zeros((bp, _PAD), jnp.float32)
    xp = xp.at[:B, :_IN_FEATURES].set(x.astype(jnp.float32))

    out = pl.pallas_call(
        _mlp_kernel,
        out_shape=jax.ShapeDtypeStruct((bp, _PAD), jnp.float32),
        grid=(n_tiles,),
        in_specs=[
            pl.BlockSpec((tb, _PAD), lambda i: (i, 0)),                 # x tile
            pl.BlockSpec((_N_LAYERS, _PAD, _PAD), lambda i: (0, 0, 0)), # weights (resident)
            pl.BlockSpec((_N_LAYERS, 1, _PAD), lambda i: (0, 0, 0)),    # biases  (resident)
        ],
        out_specs=pl.BlockSpec((tb, _PAD), lambda i: (i, 0)),
        compiler_params=pltpu.CompilerParams(
            dimension_semantics=("parallel",)),
    )(xp, w_slab, b_slab)

    return out[:B, :_OUT_FEATURES]


def init_params(key):
    """Deterministic init matching torch.nn.Linear's default:
    U(-1/sqrt(fan_in), 1/sqrt(fan_in)) for both weights and biases.
    Weights returned already transposed to (in, out)."""
    dims = [(_IN_FEATURES, _HIDDEN)] + [(_HIDDEN, _HIDDEN)] * 4 + [(_HIDDEN, _OUT_FEATURES)]
    params = []
    for (fan_in, fan_out) in dims:
        key, kw, kb = jax.random.split(key, 3)
        bound = 1.0 / math.sqrt(fan_in)
        w = jax.random.uniform(kw, (fan_in, fan_out), jnp.float32,
                               minval=-bound, maxval=bound)
        b = jax.random.uniform(kb, (fan_out,), jnp.float32,
                               minval=-bound, maxval=bound)
        params.append((w, b))
    return params


def pack_params(params):
    """Zero-pad every layer to (128, 128) / (1, 128) and stack into two slabs.

    Done once up front; the jitted `net_forward` keeps the slabs on-device so
    repeated forward passes re-use them without any host-side re-packing.
    """
    w_slab = jnp.zeros((_N_LAYERS, _PAD, _PAD), jnp.float32)
    b_slab = jnp.zeros((_N_LAYERS, 1, _PAD), jnp.float32)
    for i, (w, b) in enumerate(params):
        fi, fo = w.shape
        w_slab = w_slab.at[i, :fi, :fo].set(w)
        b_slab = b_slab.at[i, 0, :fo].set(b.reshape(-1))
    return w_slab.astype(jnp.bfloat16), b_slab


def reference_forward(x, params):
    """Pure-JAX f32 reference of the original torch module."""
    h = x
    for i, (w, b) in enumerate(params):
        h = h @ w + b.reshape(1, -1)
        if i < len(params) - 1:
            h = jnp.maximum(h, 0.0)
    return h


def reference_forward_bf16(x, w_slab, b_slab):
    """Pure-JAX reference using the same padded bf16-operand / f32-accum math
    as the kernel (tight-tolerance check)."""
    h = jnp.zeros((x.shape[0], _PAD), jnp.float32).at[:, :_IN_FEATURES].set(x)
    for i in range(_N_LAYERS):
        z = jnp.dot(h.astype(jnp.bfloat16), w_slab[i],
                    preferred_element_type=jnp.float32) + b_slab[i]
        h = jnp.maximum(z, 0.0) if i < _N_LAYERS - 1 else z
    return h[:, :_OUT_FEATURES]


if __name__ == "__main__":
    key = jax.random.PRNGKey(0)
    key, kx = jax.random.split(key)

    B = 200  # deliberately NOT a multiple of the batch tile to exercise padding
    x = jax.random.normal(kx, (B, _IN_FEATURES), dtype=jnp.float32)

    params = init_params(key)
    w_slab, b_slab = pack_params(params)

    y = net_forward(x, w_slab, b_slab, tb=128)
    y = jax.block_until_ready(y)
    assert y.shape == (B, _OUT_FEATURES)

    # Tight check against a reference with identical bf16/f32 arithmetic.
    y_bf16 = reference_forward_bf16(x, w_slab, b_slab)
    assert jnp.allclose(y, y_bf16, atol=1e-4, rtol=1e-4)

    # Loose check against the exact f32 torch-equivalent semantics
    # (bf16 matmul operands trade a little precision for MXU throughput).
    y_f32 = reference_forward(x, params)
    assert jnp.allclose(y, y_f32, atol=5e-2, rtol=5e-2)

    print("KERNEL_OK")
</pallas_src>

<mosaic_0001>
module attributes {stable_mosaic.version = 11 : i64} {
  func.func @_mlp_kernel(%arg0: i32, %arg1: memref<128x128xf32, #tpu.memory_space<vmem>>, %arg2: memref<6x128x128xbf16, #tpu.memory_space<vmem>>, %arg3: memref<6x1x128xf32, #tpu.memory_space<vmem>>, %arg4: memref<128x128xf32, #tpu.memory_space<vmem>>) attributes {dimension_semantics = [#tpu.dimension_semantics<parallel>], iteration_bounds = array<i64: 2>, scalar_prefetch = 0 : i64, scratch_operands = 0 : i64, tpu.core_type = #tpu.core_type<tc>, window_params = [{transform_indices = @transform_0, window_bounds = array<i64: 128, 128>}, {pipeline_mode = #tpu.pipeline_mode<synchronous>, transform_indices = @transform_1, window_bounds = array<i64: 6, 128, 128>}, {pipeline_mode = #tpu.pipeline_mode<synchronous>, transform_indices = @transform_2, window_bounds = array<i64: 6, 1, 128>}, {transform_indices = @transform_3, window_bounds = array<i64: 128, 128>}]} {
    %c0 = arith.constant 0 : index
    %c0_0 = arith.constant 0 : index
    %0 = vector.load %arg1[%c0, %c0_0] : memref<128x128xf32, #tpu.memory_space<vmem>>, vector<128x128xf32>
    %1 = arith.truncf %0 : vector<128x128xf32> to vector<128x128xbf16>
    %c0_1 = arith.constant 0 : index
    %c0_2 = arith.constant 0 : index
    %c0_3 = arith.constant 0 : index
    %2 = vector.load %arg2[%c0_1, %c0_2, %c0_3] : memref<6x128x128xbf16, #tpu.memory_space<vmem>>, vector<1x128x128xbf16>
    %3 = vector.shape_cast %2 : vector<1x128x128xbf16> to vector<128x128xbf16>
    %cst = arith.constant dense<0.000000e+00> : vector<128x128xf32>
    %4 = tpu.matmul %1, %3, %cst {dimension_numbers = #tpu.dot_dimension_numbers<[1], [0], [0], [1], [0, 0, 1, 1], [], []>} : vector<128x128xbf16>, vector<128x128xbf16>, vector<128x128xf32> -> vector<128x128xf32>
    %c0_4 = arith.constant 0 : index
    %c0_5 = arith.constant 0 : index
    %c0_6 = arith.constant 0 : index
    %5 = vector.load %arg3[%c0_4, %c0_5, %c0_6] : memref<6x1x128xf32, #tpu.memory_space<vmem>>, vector<1x1x128xf32>
    %6 = vector.shape_cast %5 : vector<1x1x128xf32> to vector<1x128xf32>
    %7 = vector.broadcast %6 : vector<1x128xf32> to vector<128x128xf32>
    %8 = arith.addf %4, %7 : vector<128x128xf32>
    %cst_7 = arith.constant 0.000000e+00 : f32
    %9 = vector.broadcast %cst_7 : f32 to vector<128x128xf32>
    %10 = arith.maximumf %8, %9 : vector<128x128xf32>
    %11 = arith.truncf %10 : vector<128x128xf32> to vector<128x128xbf16>
    %c1 = arith.constant 1 : index
    %c0_8 = arith.constant 0 : index
    %c0_9 = arith.constant 0 : index
    %12 = vector.load %arg2[%c1, %c0_8, %c0_9] : memref<6x128x128xbf16, #tpu.memory_space<vmem>>, vector<1x128x128xbf16>
    %13 = vector.shape_cast %12 : vector<1x128x128xbf16> to vector<128x128xbf16>
    %cst_10 = arith.constant dense<0.000000e+00> : vector<128x128xf32>
    %14 = tpu.matmul %11, %13, %cst_10 {dimension_numbers = #tpu.dot_dimension_numbers<[1], [0], [0], [1], [0, 0, 1, 1], [], []>} : vector<128x128xbf16>, vector<128x128xbf16>, vector<128x128xf32> -> vector<128x128xf32>
    %c1_11 = arith.constant 1 : index
    %c0_12 = arith.constant 0 : index
    %c0_13 = arith.constant 0 : index
    %15 = vector.load %arg3[%c1_11, %c0_12, %c0_13] : memref<6x1x128xf32, #tpu.memory_space<vmem>>, vector<1x1x128xf32>
    %16 = vector.shape_cast %15 : vector<1x1x128xf32> to vector<1x128xf32>
    %17 = vector.broadcast %16 : vector<1x128xf32> to vector<128x128xf32>
    %18 = arith.addf %14, %17 : vector<128x128xf32>
    %cst_14 = arith.constant 0.000000e+00 : f32
    %19 = vector.broadcast %cst_14 : f32 to vector<128x128xf32>
    %20 = arith.maximumf %18, %19 : vector<128x128xf32>
    %21 = arith.truncf %20 : vector<128x128xf32> to vector<128x128xbf16>
    %c2 = arith.constant 2 : index
    %c0_15 = arith.constant 0 : index
    %c0_16 = arith.constant 0 : index
    %22 = vector.load %arg2[%c2, %c0_15, %c0_16] : memref<6x128x128xbf16, #tpu.memory_space<vmem>>, vector<1x128x128xbf16>
    %23 = vector.shape_cast %22 : vector<1x128x128xbf16> to vector<128x128xbf16>
    %cst_17 = arith.constant dense<0.000000e+00> : vector<128x128xf32>
    %24 = tpu.matmul %21, %23, %cst_17 {dimension_numbers = #tpu.dot_dimension_numbers<[1], [0], [0], [1], [0, 0, 1, 1], [], []>} : vector<128x128xbf16>, vector<128x128xbf16>, vector<128x128xf32> -> vector<128x128xf32>
    %c2_18 = arith.constant 2 : index
    %c0_19 = arith.constant 0 : index
    %c0_20 = arith.constant 0 : index
    %25 = vector.load %arg3[%c2_18, %c0_19, %c0_20] : memref<6x1x128xf32, #tpu.memory_space<vmem>>, vector<1x1x128xf32>
    %26 = vector.shape_cast %25 : vector<1x1x128xf32> to vector<1x128xf32>
    %27 = vector.broadcast %26 : vector<1x128xf32> to vector<128x128xf32>
    %28 = arith.addf %24, %27 : vector<128x128xf32>
    %cst_21 = arith.constant 0.000000e+00 : f32
    %29 = vector.broadcast %cst_21 : f32 to vector<128x128xf32>
    %30 = arith.maximumf %28, %29 : vector<128x128xf32>
    %31 = arith.truncf %30 : vector<128x128xf32> to vector<128x128xbf16>
    %c3 = arith.constant 3 : index
    %c0_22 = arith.constant 0 : index
    %c0_23 = arith.constant 0 : index
    %32 = vector.load %arg2[%c3, %c0_22, %c0_23] : memref<6x128x128xbf16, #tpu.memory_space<vmem>>, vector<1x128x128xbf16>
    %33 = vector.shape_cast %32 : vector<1x128x128xbf16> to vector<128x128xbf16>
    %cst_24 = arith.constant dense<0.000000e+00> : vector<128x128xf32>
    %34 = tpu.matmul %31, %33, %cst_24 {dimension_numbers = #tpu.dot_dimension_numbers<[1], [0], [0], [1], [0, 0, 1, 1], [], []>} : vector<128x128xbf16>, vector<128x128xbf16>, vector<128x128xf32> -> vector<128x128xf32>
    %c3_25 = arith.constant 3 : index
    %c0_26 = arith.constant 0 : index
    %c0_27 = arith.constant 0 : index
    %35 = vector.load %arg3[%c3_25, %c0_26, %c0_27] : memref<6x1x128xf32, #tpu.memory_space<vmem>>, vector<1x1x128xf32>
    %36 = vector.shape_cast %35 : vector<1x1x128xf32> to vector<1x128xf32>
    %37 = vector.broadcast %36 : vector<1x128xf32> to vector<128x128xf32>
    %38 = arith.addf %34, %37 : vector<128x128xf32>
    %cst_28 = arith.constant 0.000000e+00 : f32
    %39 = vector.broadcast %cst_28 : f32 to vector<128x128xf32>
    %40 = arith.maximumf %38, %39 : vector<128x128xf32>
    %41 = arith.truncf %40 : vector<128x128xf32> to vector<128x128xbf16>
    %c4 = arith.constant 4 : index
    %c0_29 = arith.constant 0 : index
    %c0_30 = arith.constant 0 : index
    %42 = vector.load %arg2[%c4, %c0_29, %c0_30] : memref<6x128x128xbf16, #tpu.memory_space<vmem>>, vector<1x128x128xbf16>
    %43 = vector.shape_cast %42 : vector<1x128x128xbf16> to vector<128x128xbf16>
    %cst_31 = arith.constant dense<0.000000e+00> : vector<128x128xf32>
    %44 = tpu.matmul %41, %43, %cst_31 {dimension_numbers = #tpu.dot_dimension_numbers<[1], [0], [0], [1], [0, 0, 1, 1], [], []>} : vector<128x128xbf16>, vector<128x128xbf16>, vector<128x128xf32> -> vector<128x128xf32>
    %c4_32 = arith.constant 4 : index
    %c0_33 = arith.constant 0 : index
    %c0_34 = arith.constant 0 : index
    %45 = vector.load %arg3[%c4_32, %c0_33, %c0_34] : memref<6x1x128xf32, #tpu.memory_space<vmem>>, vector<1x1x128xf32>
    %46 = vector.shape_cast %45 : vector<1x1x128xf32> to vector<1x128xf32>
    %47 = vector.broadcast %46 : vector<1x128xf32> to vector<128x128xf32>
    %48 = arith.addf %44, %47 : vector<128x128xf32>
    %cst_35 = arith.constant 0.000000e+00 : f32
    %49 = vector.broadcast %cst_35 : f32 to vector<128x128xf32>
    %50 = arith.maximumf %48, %49 : vector<128x128xf32>
    %51 = arith.truncf %50 : vector<128x128xf32> to vector<128x128xbf16>
    %c5 = arith.constant 5 : index
    %c0_36 = arith.constant 0 : index
    %c0_37 = arith.constant 0 : index
    %52 = vector.load %arg2[%c5, %c0_36, %c0_37] : memref<6x128x128xbf16, #tpu.memory_space<vmem>>, vector<1x128x128xbf16>
    %53 = vector.shape_cast %52 : vector<1x128x128xbf16> to vector<128x128xbf16>
    %cst_38 = arith.constant dense<0.000000e+00> : vector<128x128xf32>
    %54 = tpu.matmul %51, %53, %cst_38 {dimension_numbers = #tpu.dot_dimension_numbers<[1], [0], [0], [1], [0, 0, 1, 1], [], []>} : vector<128x128xbf16>, vector<128x128xbf16>, vector<128x128xf32> -> vector<128x128xf32>
    %c5_39 = arith.constant 5 : index
    %c0_40 = arith.constant 0 : index
    %c0_41 = arith.constant 0 : index
    %55 = vector.load %arg3[%c5_39, %c0_40, %c0_41] : memref<6x1x128xf32, #tpu.memory_space<vmem>>, vector<1x1x128xf32>
    %56 = vector.shape_cast %55 : vector<1x1x128xf32> to vector<1x128xf32>
    %57 = vector.broadcast %56 : vector<1x128xf32> to vector<128x128xf32>
    %58 = arith.addf %54, %57 : vector<128x128xf32>
    %c0_42 = arith.constant 0 : index
    %c0_43 = arith.constant 0 : index
    %59 = vector.load %arg4[%c0_42, %c0_43] : memref<128x128xf32, #tpu.memory_space<vmem>>, vector<128x128xf32>
    tpu.vector_store %arg4[%c0_42, %c0_43], %58 {strides = array<i32>} : memref<128x128xf32, #tpu.memory_space<vmem>>, vector<128x128xf32>,
    return
  }
  func.func @transform_0(%arg0: i32) -> (i32, i32) {
    %c0_i32 = arith.constant 0 : i32
    %c0_i32_0 = arith.constant 0 : i32
    return %arg0, %c0_i32 : i32, i32
  }
  func.func @transform_1(%arg0: i32) -> (i32, i32, i32) {
    %c0_i32 = arith.constant 0 : i32
    %c0_i32_0 = arith.constant 0 : i32
    %c0_i32_1 = arith.constant 0 : i32
    %c0_i32_2 = arith.constant 0 : i32
    return %c0_i32, %c0_i32_0, %c0_i32_1 : i32, i32, i32
  }
  func.func @transform_2(%arg0: i32) -> (i32, i32, i32) {
    %c0_i32 = arith.constant 0 : i32
    %c0_i32_0 = arith.constant 0 : i32
    %c0_i32_1 = arith.constant 0 : i32
    %c0_i32_2 = arith.constant 0 : i32
    return %c0_i32, %c0_i32_0, %c0_i32_1 : i32, i32, i32
  }
  func.func @transform_3(%arg0: i32) -> (i32, i32) {
    %c0_i32 = arith.constant 0 : i32
    %c0_i32_0 = arith.constant 0 : i32
    return %arg0, %c0_i32 : i32, i32
  }
}

</mosaic_0001>

<llo_original>
// kernel: net_forward.1
$region0: #{net_forward.1}
  #allocation0 [shape = 'u32[]', space=smem, size = 0x4, offset = 0x4, fixed_abs, tag = 'smem constant byte address 0x4 - core index']
  #allocation1 [shape = 'u32[144,128]{1,0:T(1,128)}', space=vmem, size = 0x12000, scoped, tag = 'internal scratch']
  %s0 = inlined_call_operand.vmem [shape: f32[256,128], index: 0, kind: input, shape index: {}]
  %s1 = inlined_call_operand.vmem [shape: bf16[6,128,128], index: 1, kind: input, shape index: {}]
  %s2 = inlined_call_operand.vmem [shape: f32[6,1,128], index: 2, kind: input, shape index: {}]
  %s3 = inlined_call_operand.vmem [shape: f32[256,128], index: 3, kind: output, shape index: {}]
  %s4 = sld [smem:[#allocation0]]
  $region45: #{net_forward.1} parent=0
    _
  %s6 = ssub.s32 1, %s4
  %s7 = scalar_select 0, %s6, %s4
  loop: start=0, step=1, limit=4
  $region2: #{net_forward.1} parent=0 // loop_pre_header
    _
  $region3: #{net_forward.1} parent=0 // loop_header
    %s9 = sphi 0, %s13
    %p10 = scmp.ge.s32.totalorder %s9, 4
    %s19 = sphi 0, %s21
    %s22 = sphi 0, %s19
    %s23 = sphi 0, %s22
    %s39 = sphi 0, %s23
    %s43 = sphi 0, %s43
    %s45 = sphi 0, %s43
    %s46 = sphi 0, %s45
    %s60 = sphi 0, %s46
    %s64 = sphi 0, %s64
    %s66 = sphi 0, %s64
    %s67 = sphi 0, %s66
    %s81 = sphi 0, %s67
    %s87 = sphi 0, %s89
    %s90 = sphi 0, %s87
    %s91 = sphi 0, %s90
    %s107 = sphi 0, %s91
  $region4: #{net_forward.1} parent=0 // loop_header_branch
    %12 = sbr.rel (%p10) target = $region8
  $region5: #{net_forward.1} parent=0 // loop_body
    %s14 = ssub.s32 %s9, 1
    %s15 = ssub.s32 %s9, 2
    %s16 = sadd.s32 %s9, 1
    %s17 = ssub.s32 %s9, %s16
    %p18 = scmp.eq.s32.totalorder %s17, 0
    %s20 = sadd.s32 %s19, 1
    %s21 = scalar_select %p18, %s19, %s20
    %p24 = pneg %p18
    %p25 = scmp.eq.s32.totalorder %s9, 1
    %p26 = por %p24, %p25
    %p27 = scmp.ne.s32.totalorder %s19, %s22
    %p28 = scmp.eq.s32.totalorder %s9, 0
    %p29 = por %p27, %p28
    %p30 = scmp.ne.s32.totalorder %s19, %s22
    %p31 = scmp.eq.s32.totalorder %s14, 1
    %p32 = por %p30, %p31
    %p33 = scmp.ne.s32.totalorder %s22, %s23
    %p34 = scmp.eq.s32.totalorder %s14, 0
    %p35 = por %p33, %p34
    %p36 = scmp.ne.s32.totalorder %s22, %s23
    %p37 = scmp.eq.s32.totalorder %s15, 1
    %p38 = por %p36, %p37
    %p40 = scmp.ne.s32.totalorder %s23, %s39
    %p41 = scmp.eq.s32.totalorder %s15, 0
    %p42 = por %p40, %p41
    %s44 = sadd.s32 %s43, 1
    %p47 = scmp.eq.s32.totalorder %s9, 1
    %p48 = scmp.ne.s32.totalorder %s43, %s45
    %p49 = scmp.eq.s32.totalorder %s9, 0
    %p50 = por %p48, %p49
    %p51 = scmp.ne.s32.totalorder %s43, %s45
    %p52 = scmp.eq.s32.totalorder %s14, 1
    %p53 = por %p51, %p52
    %p54 = scmp.ne.s32.totalorder %s45, %s46
    %p55 = scmp.eq.s32.totalorder %s14, 0
    %p56 = por %p54, %p55
    %p57 = scmp.ne.s32.totalorder %s45, %s46
    %p58 = scmp.eq.s32.totalorder %s15, 1
    %p59 = por %p57, %p58
    %p61 = scmp.ne.s32.totalorder %s46, %s60
    %p62 = scmp.eq.s32.totalorder %s15, 0
    %p63 = por %p61, %p62
    %s65 = sadd.s32 %s64, 1
    %p68 = scmp.eq.s32.totalorder %s9, 1
    %p69 = scmp.ne.s32.totalorder %s64, %s66
    %p70 = scmp.eq.s32.totalorder %s9, 0
    %p71 = por %p69, %p70
    %p72 = scmp.ne.s32.totalorder %s64, %s66
    %p73 = scmp.eq.s32.totalorder %s14, 1
    %p74 = por %p72, %p73
    %p75 = scmp.ne.s32.totalorder %s66, %s67
    %p76 = scmp.eq.s32.totalorder %s14, 0
    %p77 = por %p75, %p76
    %p78 = scmp.ne.s32.totalorder %s66, %s67
    %p79 = scmp.eq.s32.totalorder %s15, 1
    %p80 = por %p78, %p79
    %p82 = scmp.ne.s32.totalorder %s67, %s81
    %p83 = scmp.eq.s32.totalorder %s15, 0
    %p84 = por %p82, %p83
    %s85 = ssub.s32 %s9, %s16
    %p86 = scmp.eq.s32.totalorder %s85, 0
    %s88 = sadd.s32 %s87, 1
    %s89 = scalar_select %p86, %s87, %s88
    %p92 = pneg %p86
    %p93 = scmp.eq.s32.totalorder %s9, 1
    %p94 = por %p92, %p93
    %p95 = scmp.ne.s32.totalorder %s87, %s90
    %p96 = scmp.eq.s32.totalorder %s9, 0
    %p97 = por %p95, %p96
    %p98 = scmp.ne.s32.totalorder %s87, %s90
    %p99 = scmp.eq.s32.totalorder %s14, 1
    %p100 = por %p98, %p99
    %p101 = scmp.ne.s32.totalorder %s90, %s91
    %p102 = scmp.eq.s32.totalorder %s14, 0
    %p103 = por %p101, %p102
    %p104 = scmp.ne.s32.totalorder %s90, %s91
    %p105 = scmp.eq.s32.totalorder %s15, 1
    %p106 = por %p104, %p105
    %p108 = scmp.ne.s32.totalorder %s91, %s107
    %p109 = scmp.eq.s32.totalorder %s15, 0
    %p110 = por %p108, %p109
    %p111 = scmp.le.s32.totalorder 1, %s9
    %p112 = scmp.lt.s32.totalorder %s9, 3
    %p113 = pnand %p111, %p112
    %p114 = pneg %p113
    // Predicated region
    $region9: #{net_forward.1} parent=5 // pred_check
      _
    $region10: #{net_forward.1} parent=5 // pred_check_branch
      %116 = sbr.rel (%p113) target = $region12
    $region11: #{net_forward.1} parent=5 // pred_region
      %s117 = ssub.s32 %s9, 1
      // Predicated region
      $region13: #{net_forward.1} parent=11 // pred_check
        %p118 = pneg %p56
      $region14: #{net_forward.1} parent=11 // pred_check_branch
        %120 = sbr.rel (%p118) target = $region16
      $region15: #{net_forward.1} parent=11 // pred_region
        _
      $region16: #{net_forward.1} parent=11 // pred_fallthru
        _
      // Predicated region
      $region17: #{net_forward.1} parent=11 // pred_check
        %p121 = pneg %p77
      $region18: #{net_forward.1} parent=11 // pred_check_branch
        %123 = sbr.rel (%p121) target = $region20
      $region19: #{net_forward.1} parent=11 // pred_region
        _
      $region20: #{net_forward.1} parent=11 // pred_fallthru
        _
    $region12: #{net_forward.1} parent=5 // pred_fallthru
      _
    %p124 = scmp.lt.s32.totalorder %s9, 2
    // Predicated region
    $region21: #{net_forward.1} parent=5 // pred_check
      %p125 = pneg %p124
    $region22: #{net_forward.1} parent=5 // pred_check_branch
      %127 = sbr.rel (%p125) target = $region24
    $region23: #{net_forward.1} parent=5 // pred_region
      // Predicated region
      $region25: #{net_forward.1} parent=23 // pred_check
        %p128 = pneg %p29
      $region26: #{net_forward.1} parent=23 // pred_check_branch
        %130 = sbr.rel (%p128) target = $region28
      $region27: #{net_forward.1} parent=23 // pred_region
        %s131 = smul.u32 16, %s9
        %p132 = scmp.lt.s32.totalorder %s131, 31
        %s133 = scalar_select %p132, %s131, 31
        %s134 = smul.addr %s133, 8
        %s135 = scalar_lea.vmem %s0, %s134
        %s136 = smul.u32 16, %s9
      $region28: #{net_forward.1} parent=23 // pred_fallthru
        _
    $region24: #{net_forward.1} parent=5 // pred_fallthru
      _
    %p137 = scmp.le.s32.totalorder 1, %s9
    %p138 = scmp.lt.s32.totalorder %s9, 3
    %p139 = pnand %p137, %p138
    %p140 = pneg %p139
    // Predicated region
    $region29: #{net_forward.1} parent=5 // pred_check
      _
    $region30: #{net_forward.1} parent=5 // pred_check_branch
      %142 = sbr.rel (%p139) target = $region32
    $region31: #{net_forward.1} parent=5 // pred_region
      %s143 = ssub.s32 %s9, 1
      %s144 = smul.u32 16, %s14
      %p145 = scmp.lt.s32.totalorder %s144, 31
      %s146 = scalar_select %p145, %s144, 31
      %s147 = smul.addr %s146, 8
      %s148 = scalar_lea.vmem %s0, %s147
      %p149 = pneg %p35
      %p150 = pneg %p32
      %p151 = pneg %p56
      %p152 = pneg %p53
      %p153 = pneg %p77
      %p154 = pneg %p74
      %p155 = pneg %p103
      %p156 = pneg %p100
      %s157 = smul.u32 16, %s14
      %p158 = scmp.lt.s32.totalorder %s157, 31
      %s159 = scalar_select %p158, %s157, 31
      %s160 = smul.addr %s159, 8
      %s161 = scalar_lea.vmem %s3, %s160
      %s162 = smul.u32 16, %s14
      %p163 = scmp.lt.s32.totalorder %s162, 31
      %s164 = scalar_select %p163, %s162, 31
      %s165 = smul.addr %s164, 8
      %s166 = scalar_lea.vmem %s0, %s165
      %s167 = smul.u32 16, %s14
      %s168 = smul.u32 16, %s14
      %p169 = scmp.lt.s32.totalorder %s168, 31
      %s170 = scalar_select %p169, %s168, 31
      %s171 = smul.addr %s170, 8
      %s172 = scalar_lea.vmem %s3, %s171
      %s173 = smul.u32 16, %s14
      %v175 = vld [vmem:[%s166] sm:$0xff]
      %v176 = vld [vmem:[%s166 + $0x8] sm:$0xff]
      %v177 = vld [vmem:[%s166 + $0x10] sm:$0xff]
      %v178 = vld [vmem:[%s166 + $0x18] sm:$0xff]
      %v179 = vld [vmem:[%s166 + $0x20] sm:$0xff]
      %v180 = vld [vmem:[%s166 + $0x28] sm:$0xff]
      %v181 = vld [vmem:[%s166 + $0x30] sm:$0xff]
      %v182 = vld [vmem:[%s166 + $0x38] sm:$0xff]
      %v183 = vld [vmem:[%s166 + $0x40] sm:$0xff]
      %v184 = vld [vmem:[%s166 + $0x48] sm:$0xff]
      %v185 = vld [vmem:[%s166 + $0x50] sm:$0xff]
      %v186 = vld [vmem:[%s166 + $0x58] sm:$0xff]
      %v187 = vld [vmem:[%s166 + $0x60] sm:$0xff]
      %v188 = vld [vmem:[%s166 + $0x68] sm:$0xff]
      %v189 = vld [vmem:[%s166 + $0x70] sm:$0xff]
      %v190 = vld [vmem:[%s166 + $0x78] sm:$0xff]
      %v191 = vpack.c.bf16 %v176, %v175
      %v192 = vpack.c.bf16 %v178, %v177
      %v193 = vpack.c.bf16 %v180, %v179
      %v194 = vpack.c.bf16 %v182, %v181
      %v195 = vpack.c.bf16 %v184, %v183
      %v196 = vpack.c.bf16 %v186, %v185
      %v197 = vpack.c.bf16 %v188, %v187
      %v198 = vpack.c.bf16 %v190, %v189
      %v199 = vld [vmem:[%s1] sm:$0xf]
      %v200 = vld [vmem:[%s1 + $0x4] sm:$0xf]
      %v201 = vld [vmem:[%s1 + $0x8] sm:$0xf]
      %v202 = vld [vmem:[%s1 + $0xc] sm:$0xf]
      %v203 = vld [vmem:[%s1 + $0x10] sm:$0xf]
      %v204 = vld [vmem:[%s1 + $0x14] sm:$0xf]
      %v205 = vld [vmem:[%s1 + $0x18] sm:$0xf]
      %v206 = vld [vmem:[%s1 + $0x1c] sm:$0xf]
      %v207 = vld [vmem:[%s1 + $0x20] sm:$0xf]
      %v208 = vld [vmem:[%s1 + $0x24] sm:$0xf]
      %v209 = vld [vmem:[%s1 + $0x28] sm:$0xf]
      %v210 = vld [vmem:[%s1 + $0x2c] sm:$0xf]
      %v211 = vld [vmem:[%s1 + $0x30] sm:$0xf]
      %v212 = vld [vmem:[%s1 + $0x34] sm:$0xf]
      %v213 = vld [vmem:[%s1 + $0x38] sm:$0xf]
      %v214 = vld [vmem:[%s1 + $0x3c] sm:$0xf]
      %v215 = vld [vmem:[%s2] sm:$0x1]
      %v217 = vlaneseq
      %v218 = vshrl.u32 %v217, 7
      %v219 = vsub.s32 0, %v218
      %v220 = vrot.slane %v215, %v219
      %v238 = vunpack.c.l.b16 %v199
      %v239 = vunpack.c.l.b16 %v200
      %v240 = vunpack.c.l.b16 %v201
      %v241 = vunpack.c.l.b16 %v202
      %v242 = vunpack.c.l.b16 %v203
      %v243 = vunpack.c.l.b16 %v204
      %v244 = vunpack.c.l.b16 %v205
      %v245 = vunpack.c.l.b16 %v206
      %v246 = vunpack.c.l.b16 %v207
      %v247 = vunpack.c.l.b16 %v208
      %v248 = vunpack.c.l.b16 %v209
      %v249 = vunpack.c.l.b16 %v210
      %v250 = vunpack.c.l.b16 %v211
      %v251 = vunpack.c.l.b16 %v212
      %v252 = vunpack.c.l.b16 %v213
      %v253 = vunpack.c.l.b16 %v214
      %v254 = vpack.c.b16 %v239, %v238
      %v255 = vpack.c.b16 %v241, %v240
      %v256 = vpack.c.b16 %v243, %v242
      %v257 = vpack.c.b16 %v245, %v244
      %v258 = vpack.c.b16 %v247, %v246
      %v259 = vpack.c.b16 %v249, %v248
      %v260 = vpack.c.b16 %v251, %v250
      %v261 = vpack.c.b16 %v253, %v252
      %270 = vmatprep.subr.bf16.mxu0 0
      %271 = vmatpush1.bf16.msra.mxu0 %v254
      %272 = vmatprep.subr.bf16.mxu0 0
      %273 = vmatpush1.bf16.msra.mxu0 %v255
      %274 = vmatprep.subr.bf16.mxu0 0
      %275 = vmatpush1.bf16.msra.mxu0 %v256
      %276 = vmatprep.subr.bf16.mxu0 0
      %277 = vmatpush1.bf16.msra.mxu0 %v257
      %278 = vmatprep.subr.bf16.mxu0 0
      %279 = vmatpush1.bf16.msra.mxu0 %v258
      %280 = vmatprep.subr.bf16.mxu0 0
      %281 = vmatpush1.bf16.msra.mxu0 %v259
      %282 = vmatprep.subr.bf16.mxu0 0
      %283 = vmatpush1.bf16.msra.mxu0 %v260
      %284 = vmatprep.subr.bf16.mxu0 0
      %285 = vmatpush1.bf16.msra.mxu0 %v261
      %286 = vmatprep.subr.bf16.mxu0 0
      %287 = vmatpush1.bf16.msra.mxu0 0
      %288 = vmatprep.subr.bf16.mxu0 0
      %289 = vmatpush1.bf16.msra.mxu0 0
      %290 = vmatprep.subr.bf16.mxu0 0
      %291 = vmatpush1.bf16.msra.mxu0 0
      %292 = vmatprep.subr.bf16.mxu0 0
      %293 = vmatpush1.bf16.msra.mxu0 0
      %294 = vmatprep.subr.bf16.mxu0 0
      %295 = vmatpush1.bf16.msra.mxu0 0
      %296 = vmatprep.subr.bf16.mxu0 0
      %297 = vmatpush1.bf16.msra.mxu0 0
      %298 = vmatprep.subr.bf16.mxu0 0
      %299 = vmatpush1.bf16.msra.mxu0 0
      %300 = vmatprep.subr.bf16.mxu0 0
      %301 = vmatpush1.bf16.msra.mxu0 0
      %302 = vmatprep.mubr.bf16.mxu0 0
      %303 = vmatmul.mubr.bf16.gmra.mrb[0].mxu0 %v191
      %v304 = vpop.f32.mrb[0].mxu0
      %v305 = vadd.f32 %v220, %v304
      %v306 = vpop.f32.mrb[0].mxu0
      %v307 = vpop.f32.mrb[0].mxu0
      %v308 = vadd.f32 %v220, %v307
      %v309 = vpop.f32.mrb[0].mxu0
      %310 = vmatprep.mubr.bf16.mxu0 0
      %311 = vmatmul.mubr.bf16.gmra.mrb[0].mxu0 %v192
      %v312 = vpop.f32.mrb[0].mxu0
      %v313 = vadd.f32 %v220, %v312
      %v314 = vpop.f32.mrb[0].mxu0
      %v315 = vpop.f32.mrb[0].mxu0
      %v316 = vadd.f32 %v220, %v315
      %v317 = vpop.f32.mrb[0].mxu0
      %318 = vmatprep.mubr.bf16.mxu0 0
      %319 = vmatmul.mubr.bf16.gmra.mrb[0].mxu0 %v193
      %v320 = vpop.f32.mrb[0].mxu0
      %v321 = vadd.f32 %v220, %v320
      %v322 = vpop.f32.mrb[0].mxu0
      %v323 = vpop.f32.mrb[0].mxu0
      %v324 = vadd.f32 %v220, %v323
      %v325 = vpop.f32.mrb[0].mxu0
      %326 = vmatprep.mubr.bf16.mxu0 0
      %327 = vmatmul.mubr.bf16.gmra.mrb[0].mxu0 %v194
      %v328 = vpop.f32.mrb[0].mxu0
      %v329 = vadd.f32 %v220, %v328
      %v330 = vpop.f32.mrb[0].mxu0
      %v331 = vpop.f32.mrb[0].mxu0
      %v332 = vadd.f32 %v220, %v331
      %v333 = vpop.f32.mrb[0].mxu0
      %334 = vmatprep.mubr.bf16.mxu0 0
      %335 = vmatmul.mubr.bf16.gmra.mrb[0].mxu0 %v195
      %v336 = vpop.f32.mrb[0].mxu0
      %v337 = vadd.f32 %v220, %v336
      %v338 = vpop.f32.mrb[0].mxu0
      %v339 = vpop.f32.mrb[0].mxu0
      %v340 = vadd.f32 %v220, %v339
      %v341 = vpop.f32.mrb[0].mxu0
      %342 = vmatprep.mubr.bf16.mxu0 0
      %343 = vmatmul.mubr.bf16.gmra.mrb[0].mxu0 %v196
      %v344 = vpop.f32.mrb[0].mxu0
      %v345 = vadd.f32 %v220, %v344
      %v346 = vpop.f32.mrb[0].mxu0
      %v347 = vpop.f32.mrb[0].mxu0
      %v348 = vadd.f32 %v220, %v347
      %v349 = vpop.f32.mrb[0].mxu0
      %350 = vmatprep.mubr.bf16.mxu0 0
      %351 = vmatmul.mubr.bf16.gmra.mrb[0].mxu0 %v197
      %v352 = vpop.f32.mrb[0].mxu0
      %v353 = vadd.f32 %v220, %v352
      %v354 = vpop.f32.mrb[0].mxu0
      %v355 = vpop.f32.mrb[0].mxu0
      %v356 = vadd.f32 %v220, %v355
      %v357 = vpop.f32.mrb[0].mxu0
      %358 = vmatprep.mubr.bf16.mxu0 0
      %359 = vmatmul.mubr.bf16.gmra.mrb[0].mxu0 %v198
      %v360 = vpop.f32.mrb[0].mxu0
      %v361 = vadd.f32 %v220, %v360
      %v362 = vpop.f32.mrb[0].mxu0
      %v363 = vpop.f32.mrb[0].mxu0
      %v364 = vadd.f32 %v220, %v363
      %v365 = vpop.f32.mrb[0].mxu0
      %366 = vdwg.mxu0
      %v367 = vmax.f32 %v305, 0.0
      %v368 = vmax.f32 %v308, 0.0
      %v369 = vmax.f32 %v313, 0.0
      %v370 = vmax.f32 %v316, 0.0
      %v371 = vmax.f32 %v321, 0.0
      %v372 = vmax.f32 %v324, 0.0
      %v373 = vmax.f32 %v329, 0.0
      %v374 = vmax.f32 %v332, 0.0
      %v375 = vmax.f32 %v337, 0.0
      %v376 = vmax.f32 %v340, 0.0
      %v377 = vmax.f32 %v345, 0.0
      %v378 = vmax.f32 %v348, 0.0
      %v379 = vmax.f32 %v353, 0.0
      %v380 = vmax.f32 %v356, 0.0
      %v381 = vmax.f32 %v361, 0.0
      %v382 = vmax.f32 %v364, 0.0
      %v383 = vpack.c.bf16 %v368, %v367
      %v384 = vpack.c.bf16 %v370, %v369
      %v385 = vpack.c.bf16 %v372, %v371
      %v386 = vpack.c.bf16 %v374, %v373
      %v387 = vpack.c.bf16 %v376, %v375
      %v388 = vpack.c.bf16 %v378, %v377
      %v389 = vpack.c.bf16 %v380, %v379
      %v390 = vpack.c.bf16 %v382, %v381
      %s391 = scalar_lea.vmem %s1, 64
      %v392 = vld [vmem:[%s391] sm:$0xf]
      %v393 = vld [vmem:[%s391 + $0x4] sm:$0xf]
      %v394 = vld [vmem:[%s391 + $0x8] sm:$0xf]
      %v395 = vld [vmem:[%s391 + $0xc] sm:$0xf]
      %v396 = vld [vmem:[%s391 + $0x10] sm:$0xf]
      %v397 = vld [vmem:[%s391 + $0x14] sm:$0xf]
      %v398 = vld [vmem:[%s391 + $0x18] sm:$0xf]
      %v399 = vld [vmem:[%s391 + $0x1c] sm:$0xf]
      %v400 = vld [vmem:[%s391 + $0x20] sm:$0xf]
      %v401 = vld [vmem:[%s391 + $0x24] sm:$0xf]
      %v402 = vld [vmem:[%s391 + $0x28] sm:$0xf]
      %v403 = vld [vmem:[%s391 + $0x2c] sm:$0xf]
      %v404 = vld [vmem:[%s391 + $0x30] sm:$0xf]
      %v405 = vld [vmem:[%s391 + $0x34] sm:$0xf]
      %v406 = vld [vmem:[%s391 + $0x38] sm:$0xf]
      %v407 = vld [vmem:[%s391 + $0x3c] sm:$0xf]
      %s408 = scalar_lea.vmem %s2, 1
      %v409 = vld [vmem:[%s408] sm:$0x1]
      %v411 = vlaneseq
      %v412 = vshrl.u32 %v411, 7
      %v413 = vsub.s32 0, %v412
      %v414 = vrot.slane %v409, %v413
      %v432 = vunpack.c.l.b16 %v392
      %v433 = vunpack.c.l.b16 %v393
      %v434 = vunpack.c.l.b16 %v394
      %v435 = vunpack.c.l.b16 %v395
      %v436 = vunpack.c.l.b16 %v396
      %v437 = vunpack.c.l.b16 %v397
      %v438 = vunpack.c.l.b16 %v398
      %v439 = vunpack.c.l.b16 %v399
      %v440 = vunpack.c.l.b16 %v400
      %v441 = vunpack.c.l.b16 %v401
      %v442 = vunpack.c.l.b16 %v402
      %v443 = vunpack.c.l.b16 %v403
      %v444 = vunpack.c.l.b16 %v404
      %v445 = vunpack.c.l.b16 %v405
      %v446 = vunpack.c.l.b16 %v406
      %v447 = vunpack.c.l.b16 %v407
      %v448 = vpack.c.b16 %v433, %v432
      %v449 = vpack.c.b16 %v435, %v434
      %v450 = vpack.c.b16 %v437, %v436
      %v451 = vpack.c.b16 %v439, %v438
      %v452 = vpack.c.b16 %v441, %v440
      %v453 = vpack.c.b16 %v443, %v442
      %v454 = vpack.c.b16 %v445, %v444
      %v455 = vpack.c.b16 %v447, %v446
      %464 = vmatprep.subr.bf16.mxu0 0
      %465 = vmatpush1.bf16.msra.mxu0 %v448
      %466 = vmatprep.subr.bf16.mxu0 0
      %467 = vmatpush1.bf16.msra.mxu0 %v449
      %468 = vmatprep.subr.bf16.mxu0 0
      %469 = vmatpush1.bf16.msra.mxu0 %v450
      %470 = vmatprep.subr.bf16.mxu0 0
      %471 = vmatpush1.bf16.msra.mxu0 %v451
      %472 = vmatprep.subr.bf16.mxu0 0
      %473 = vmatpush1.bf16.msra.mxu0 %v452
      %474 = vmatprep.subr.bf16.mxu0 0
      %475 = vmatpush1.bf16.msra.mxu0 %v453
      %476 = vmatprep.subr.bf16.mxu0 0
      %477 = vmatpush1.bf16.msra.mxu0 %v454
      %478 = vmatprep.subr.bf16.mxu0 0
      %479 = vmatpush1.bf16.msra.mxu0 %v455
      %480 = vmatprep.subr.bf16.mxu0 0
      %481 = vmatpush1.bf16.msra.mxu0 0
      %482 = vmatprep.subr.bf16.mxu0 0
      %483 = vmatpush1.bf16.msra.mxu0 0
      %484 = vmatprep.subr.bf16.mxu0 0
      %485 = vmatpush1.bf16.msra.mxu0 0
      %486 = vmatprep.subr.bf16.mxu0 0
      %487 = vmatpush1.bf16.msra.mxu0 0
      %488 = vmatprep.subr.bf16.mxu0 0
      %489 = vmatpush1.bf16.msra.mxu0 0
      %490 = vmatprep.subr.bf16.mxu0 0
      %491 = vmatpush1.bf16.msra.mxu0 0
      %492 = vmatprep.subr.bf16.mxu0 0
      %493 = vmatpush1.bf16.msra.mxu0 0
      %494 = vmatprep.subr.bf16.mxu0 0
      %495 = vmatpush1.bf16.msra.mxu0 0
      %496 = vmatprep.mubr.bf16.mxu0 0
      %497 = vmatmul.mubr.bf16.gmra.mrb[0].mxu0 %v383
      %v498 = vpop.f32.mrb[0].mxu0
      %v499 = vadd.f32 %v414, %v498
      %v500 = vpop.f32.mrb[0].mxu0
      %v501 = vpop.f32.mrb[0].mxu0
      %v502 = vadd.f32 %v414, %v501
      %v503 = vpop.f32.mrb[0].mxu0
      %504 = vmatprep.mubr.bf16.mxu0 0
      %505 = vmatmul.mubr.bf16.gmra.mrb[0].mxu0 %v384
      %v506 = vpop.f32.mrb[0].mxu0
      %v507 = vadd.f32 %v414, %v506
      %v508 = vpop.f32.mrb[0].mxu0
      %v509 = vpop.f32.mrb[0].mxu0
      %v510 = vadd.f32 %v414, %v509
      %v511 = vpop.f32.mrb[0].mxu0
      %512 = vmatprep.mubr.bf16.mxu0 0
      %513 = vmatmul.mubr.bf16.gmra.mrb[0].mxu0 %v385
      %v514 = vpop.f32.mrb[0].mxu0
      %v515 = vadd.f32 %v414, %v514
      %v516 = vpop.f32.mrb[0].mxu0
      %v517 = vpop.f32.mrb[0].mxu0
      %v518 = vadd.f32 %v414, %v517
      %v519 = vpop.f32.mrb[0].mxu0
      %520 = vmatprep.mubr.bf16.mxu0 0
      %521 = vmatmul.mubr.bf16.gmra.mrb[0].mxu0 %v386
      %v522 = vpop.f32.mrb[0].mxu0
      %v523 = vadd.f32 %v414, %v522
      %v524 = vpop.f32.mrb[0].mxu0
      %v525 = vpop.f32.mrb[0].mxu0
      %v526 = vadd.f32 %v414, %v525
      %v527 = vpop.f32.mrb[0].mxu0
      %528 = vmatprep.mubr.bf16.mxu0 0
      %529 = vmatmul.mubr.bf16.gmra.mrb[0].mxu0 %v387
      %v530 = vpop.f32.mrb[0].mxu0
      %v531 = vadd.f32 %v414, %v530
      %v532 = vpop.f32.mrb[0].mxu0
      %v533 = vpop.f32.mrb[0].mxu0
      %v534 = vadd.f32 %v414, %v533
      %v535 = vpop.f32.mrb[0].mxu0
      %536 = vmatprep.mubr.bf16.mxu0 0
      %537 = vmatmul.mubr.bf16.gmra.mrb[0].mxu0 %v388
      %v538 = vpop.f32.mrb[0].mxu0
      %v539 = vadd.f32 %v414, %v538
      %v540 = vpop.f32.mrb[0].mxu0
      %v541 = vpop.f32.mrb[0].mxu0
      %v542 = vadd.f32 %v414, %v541
      %v543 = vpop.f32.mrb[0].mxu0
      %544 = vmatprep.mubr.bf16.mxu0 0
      %545 = vmatmul.mubr.bf16.gmra.mrb[0].mxu0 %v389
      %v546 = vpop.f32.mrb[0].mxu0
      %v547 = vadd.f32 %v414, %v546
      %v548 = vpop.f32.mrb[0].mxu0
      %v549 = vpop.f32.mrb[0].mxu0
      %v550 = vadd.f32 %v414, %v549
      %v551 = vpop.f32.mrb[0].mxu0
      %552 = vmatprep.mubr.bf16.mxu0 0
      %553 = vmatmul.mubr.bf16.gmra.mrb[0].mxu0 %v390
      %v554 = vpop.f32.mrb[0].mxu0
      %v555 = vadd.f32 %v414, %v554
      %v556 = vpop.f32.mrb[0].mxu0
      %v557 = vpop.f32.mrb[0].mxu0
      %v558 = vadd.f32 %v414, %v557
      %v559 = vpop.f32.mrb[0].mxu0
      %560 = vdwg.mxu0
      %v561 = vmax.f32 %v499, 0.0
      %v562 = vmax.f32 %v502, 0.0
      %v563 = vmax.f32 %v507, 0.0
      %v564 = vmax.f32 %v510, 0.0
      %v565 = vmax.f32 %v515, 0.0
      %v566 = vmax.f32 %v518, 0.0
      %v567 = vmax.f32 %v523, 0.0
      %v568 = vmax.f32 %v526, 0.0
      %v569 = vmax.f32 %v531, 0.0
      %v570 = vmax.f32 %v534, 0.0
      %v571 = vmax.f32 %v539, 0.0
      %v572 = vmax.f32 %v542, 0.0
      %v573 = vmax.f32 %v547, 0.0
      %v574 = vmax.f32 %v550, 0.0
      %v575 = vmax.f32 %v555, 0.0
      %v576 = vmax.f32 %v558, 0.0
      %v577 = vpack.c.bf16 %v562, %v561
      %v578 = vpack.c.bf16 %v564, %v563
      %v579 = vpack.c.bf16 %v566, %v565
      %v580 = vpack.c.bf16 %v568, %v567
      %v581 = vpack.c.bf16 %v570, %v569
      %v582 = vpack.c.bf16 %v572, %v571
      %v583 = vpack.c.bf16 %v574, %v573
      %v584 = vpack.c.bf16 %v576, %v575
      %s585 = scalar_lea.vmem %s1, 128
      %v586 = vld [vmem:[%s585] sm:$0xf]
      %v587 = vld [vmem:[%s585 + $0x4] sm:$0xf]
      %v588 = vld [vmem:[%s585 + $0x8] sm:$0xf]
      %v589 = vld [vmem:[%s585 + $0xc] sm:$0xf]
      %v590 = vld [vmem:[%s585 + $0x10] sm:$0xf]
      %v591 = vld [vmem:[%s585 + $0x14] sm:$0xf]
      %v592 = vld [vmem:[%s585 + $0x18] sm:$0xf]
      %v593 = vld [vmem:[%s585 + $0x1c] sm:$0xf]
      %v594 = vld [vmem:[%s585 + $0x20] sm:$0xf]
      %v595 = vld [vmem:[%s585 + $0x24] sm:$0xf]
      %v596 = vld [vmem:[%s585 + $0x28] sm:$0xf]
      %v597 = vld [vmem:[%s585 + $0x2c] sm:$0xf]
      %v598 = vld [vmem:[%s585 + $0x30] sm:$0xf]
      %v599 = vld [vmem:[%s585 + $0x34] sm:$0xf]
      %v600 = vld [vmem:[%s585 + $0x38] sm:$0xf]
      %v601 = vld [vmem:[%s585 + $0x3c] sm:$0xf]
      %s602 = scalar_lea.vmem %s2, 2
      %v603 = vld [vmem:[%s602] sm:$0x1]
      %v605 = vlaneseq
      %v606 = vshrl.u32 %v605, 7
      %v607 = vsub.s32 0, %v606
      %v608 = vrot.slane %v603, %v607
      %v626 = vunpack.c.l.b16 %v586
      %v627 = vunpack.c.l.b16 %v587
      %v628 = vunpack.c.l.b16 %v588
      %v629 = vunpack.c.l.b16 %v589
      %v630 = vunpack.c.l.b16 %v590
      %v631 = vunpack.c.l.b16 %v591
      %v632 = vunpack.c.l.b16 %v592
      %v633 = vunpack.c.l.b16 %v593
      %v634 = vunpack.c.l.b16 %v594
      %v635 = vunpack.c.l.b16 %v595
      %v636 = vunpack.c.l.b16 %v596
      %v637 = vunpack.c.l.b16 %v597
      %v638 = vunpack.c.l.b16 %v598
      %v639 = vunpack.c.l.b16 %v599
      %v640 = vunpack.c.l.b16 %v600
      %v641 = vunpack.c.l.b16 %v601
      %v642 = vpack.c.b16 %v627, %v626
      %v643 = vpack.c.b16 %v629, %v628
      %v644 = vpack.c.b16 %v631, %v630
      %v645 = vpack.c.b16 %v633, %v632
      %v646 = vpack.c.b16 %v635, %v634
      %v647 = vpack.c.b16 %v637, %v636
      %v648 = vpack.c.b16 %v639, %v638
      %v649 = vpack.c.b16 %v641, %v640
      %658 = vmatprep.subr.bf16.mxu0 0
      %659 = vmatpush1.bf16.msra.mxu0 %v642
      %660 = vmatprep.subr.bf16.mxu0 0
      %661 = vmatpush1.bf16.msra.mxu0 %v643
      %662 = vmatprep.subr.bf16.mxu0 0
      %663 = vmatpush1.bf16.msra.mxu0 %v644
      %664 = vmatprep.subr.bf16.mxu0 0
      %665 = vmatpush1.bf16.msra.mxu0 %v645
      %666 = vmatprep.subr.bf16.mxu0 0
      %667 = vmatpush1.bf16.msra.mxu0 %v646
      %668 = vmatprep.subr.bf16.mxu0 0
      %669 = vmatpush1.bf16.msra.mxu0 %v647
      %670 = vmatprep.subr.bf16.mxu0 0
      %671 = vmatpush1.bf16.msra.mxu0 %v648
      %672 = vmatprep.subr.bf16.mxu0 0
      %673 = vmatpush1.bf16.msra.mxu0 %v649
      %674 = vmatprep.subr.bf16.mxu0 0
      %675 = vmatpush1.bf16.msra.mxu0 0
      %676 = vmatprep.subr.bf16.mxu0 0
      %677 = vmatpush1.bf16.msra.mxu0 0
      %678 = vmatprep.subr.bf16.mxu0 0
      %679 = vmatpush1.bf16.msra.mxu0 0
      %680 = vmatprep.subr.bf16.mxu0 0
      %681 = vmatpush1.bf16.msra.mxu0 0
      %682 = vmatprep.subr.bf16.mxu0 0
      %683 = vmatpush1.bf16.msra.mxu0 0
      %684 = vmatprep.subr.bf16.mxu0 0
      %685 = vmatpush1.bf16.msra.mxu0 0
      %686 = vmatprep.subr.bf16.mxu0 0
      %687 = vmatpush1.bf16.msra.mxu0 0
      %688 = vmatprep.subr.bf16.mxu0 0
      %689 = vmatpush1.bf16.msra.mxu0 0
      %690 = vmatprep.mubr.bf16.mxu0 0
      %691 = vmatmul.mubr.bf16.gmra.mrb[0].mxu0 %v577
      %v692 = vpop.f32.mrb[0].mxu0
      %v693 = vadd.f32 %v608, %v692
      %v694 = vpop.f32.mrb[0].mxu0
      %v695 = vpop.f32.mrb[0].mxu0
      %v696 = vadd.f32 %v608, %v695
      %v697 = vpop.f32.mrb[0].mxu0
      %698 = vmatprep.mubr.bf16.mxu0 0
      %699 = vmatmul.mubr.bf16.gmra.mrb[0].mxu0 %v578
      %v700 = vpop.f32.mrb[0].mxu0
      %v701 = vadd.f32 %v608, %v700
      %v702 = vpop.f32.mrb[0].mxu0
      %v703 = vpop.f32.mrb[0].mxu0
      %v704 = vadd.f32 %v608, %v703
      %v705 = vpop.f32.mrb[0].mxu0
      %706 = vmatprep.mubr.bf16.mxu0 0
      %707 = vmatmul.mubr.bf16.gmra.mrb[0].mxu0 %v579
      %v708 = vpop.f32.mrb[0].mxu0
      %v709 = vadd.f32 %v608, %v708
      %v710 = vpop.f32.mrb[0].mxu0
      %v711 = vpop.f32.mrb[0].mxu0
      %v712 = vadd.f32 %v608, %v711
      %v713 = vpop.f32.mrb[0].mxu0
      %714 = vmatprep.mubr.bf16.mxu0 0
      %715 = vmatmul.mubr.bf16.gmra.mrb[0].mxu0 %v580
      %v716 = vpop.f32.mrb[0].mxu0
      %v717 = vadd.f32 %v608, %v716
      %v718 = vpop.f32.mrb[0].mxu0
      %v719 = vpop.f32.mrb[0].mxu0
      %v720 = vadd.f32 %v608, %v719
      %v721 = vpop.f32.mrb[0].mxu0
      %722 = vmatprep.mubr.bf16.mxu0 0
      %723 = vmatmul.mubr.bf16.gmra.mrb[0].mxu0 %v581
      %v724 = vpop.f32.mrb[0].mxu0
      %v725 = vadd.f32 %v608, %v724
      %v726 = vpop.f32.mrb[0].mxu0
      %v727 = vpop.f32.mrb[0].mxu0
      %v728 = vadd.f32 %v608, %v727
      %v729 = vpop.f32.mrb[0].mxu0
      %730 = vmatprep.mubr.bf16.mxu0 0
      %731 = vmatmul.mubr.bf16.gmra.mrb[0].mxu0 %v582
      %v732 = vpop.f32.mrb[0].mxu0
      %v733 = vadd.f32 %v608, %v732
      %v734 = vpop.f32.mrb[0].mxu0
      %v735 = vpop.f32.mrb[0].mxu0
      %v736 = vadd.f32 %v608, %v735
      %v737 = vpop.f32.mrb[0].mxu0
      %738 = vmatprep.mubr.bf16.mxu0 0
      %739 = vmatmul.mubr.bf16.gmra.mrb[0].mxu0 %v583
      %v740 = vpop.f32.mrb[0].mxu0
      %v741 = vadd.f32 %v608, %v740
      %v742 = vpop.f32.mrb[0].mxu0
      %v743 = vpop.f32.mrb[0].mxu0
      %v744 = vadd.f32 %v608, %v743
      %v745 = vpop.f32.mrb[0].mxu0
      %746 = vmatprep.mubr.bf16.mxu0 0
      %747 = vmatmul.mubr.bf16.gmra.mrb[0].mxu0 %v584
      %v748 = vpop.f32.mrb[0].mxu0
      %v749 = vadd.f32 %v608, %v748
      %v750 = vpop.f32.mrb[0].mxu0
      %v751 = vpop.f32.mrb[0].mxu0
      %v752 = vadd.f32 %v608, %v751
      %v753 = vpop.f32.mrb[0].mxu0
      %754 = vdwg.mxu0
      %v755 = vmax.f32 %v693, 0.0
      %v756 = vmax.f32 %v696, 0.0
      %v757 = vmax.f32 %v701, 0.0
      %v758 = vmax.f32 %v704, 0.0
      %v759 = vmax.f32 %v709, 0.0
      %v760 = vmax.f32 %v712, 0.0
      %v761 = vmax.f32 %v717, 0.0
      %v762 = vmax.f32 %v720, 0.0
      %v763 = vmax.f32 %v725, 0.0
      %v764 = vmax.f32 %v728, 0.0
      %v765 = vmax.f32 %v733, 0.0
      %v766 = vmax.f32 %v736, 0.0
      %v767 = vmax.f32 %v741, 0.0
      %v768 = vmax.f32 %v744, 0.0
      %v769 = vmax.f32 %v749, 0.0
      %v770 = vmax.f32 %v752, 0.0
      %v771 = vpack.c.bf16 %v756, %v755
      %v772 = vpack.c.bf16 %v758, %v757
      %v773 = vpack.c.bf16 %v760, %v759
      %v774 = vpack.c.bf16 %v762, %v761
      %v775 = vpack.c.bf16 %v764, %v763
      %v776 = vpack.c.bf16 %v766, %v765
      %v777 = vpack.c.bf16 %v768, %v767
      %v778 = vpack.c.bf16 %v770, %v769
      %s779 = scalar_lea.vmem %s1, 192
      %v780 = vld [vmem:[%s779] sm:$0xf]
      %v781 = vld [vmem:[%s779 + $0x4] sm:$0xf]
      %v782 = vld [vmem:[%s779 + $0x8] sm:$0xf]
      %v783 = vld [vmem:[%s779 + $0xc] sm:$0xf]
      %v784 = vld [vmem:[%s779 + $0x10] sm:$0xf]
      %v785 = vld [vmem:[%s779 + $0x14] sm:$0xf]
      %v786 = vld [vmem:[%s779 + $0x18] sm:$0xf]
      %v787 = vld [vmem:[%s779 + $0x1c] sm:$0xf]
      %v788 = vld [vmem:[%s779 + $0x20] sm:$0xf]
      %v789 = vld [vmem:[%s779 + $0x24] sm:$0xf]
      %v790 = vld [vmem:[%s779 + $0x28] sm:$0xf]
      %v791 = vld [vmem:[%s779 + $0x2c] sm:$0xf]
      %v792 = vld [vmem:[%s779 + $0x30] sm:$0xf]
      %v793 = vld [vmem:[%s779 + $0x34] sm:$0xf]
      %v794 = vld [vmem:[%s779 + $0x38] sm:$0xf]
      %v795 = vld [vmem:[%s779 + $0x3c] sm:$0xf]
      %s796 = scalar_lea.vmem %s2, 3
      %v797 = vld [vmem:[%s796] sm:$0x1]
      %v799 = vlaneseq
      %v800 = vshrl.u32 %v799, 7
      %v801 = vsub.s32 0, %v800
      %v802 = vrot.slane %v797, %v801
      %v820 = vunpack.c.l.b16 %v780
      %v821 = vunpack.c.l.b16 %v781
      %v822 = vunpack.c.l.b16 %v782
      %v823 = vunpack.c.l.b16 %v783
      %v824 = vunpack.c.l.b16 %v784
      %v825 = vunpack.c.l.b16 %v785
      %v826 = vunpack.c.l.b16 %v786
      %v827 = vunpack.c.l.b16 %v787
      %v828 = vunpack.c.l.b16 %v788
      %v829 = vunpack.c.l.b16 %v789
      %v830 = vunpack.c.l.b16 %v790
      %v831 = vunpack.c.l.b16 %v791
      %v832 = vunpack.c.l.b16 %v792
      %v833 = vunpack.c.l.b16 %v793
      %v834 = vunpack.c.l.b16 %v794
      %v835 = vunpack.c.l.b16 %v795
      %v836 = vpack.c.b16 %v821, %v820
      %v837 = vpack.c.b16 %v823, %v822
      %v838 = vpack.c.b16 %v825, %v824
      %v839 = vpack.c.b16 %v827, %v826
      %v840 = vpack.c.b16 %v829, %v828
      %v841 = vpack.c.b16 %v831, %v830
      %v842 = vpack.c.b16 %v833, %v832
      %v843 = vpack.c.b16 %v835, %v834
      %852 = vmatprep.subr.bf16.mxu0 0
      %853 = vmatpush1.bf16.msra.mxu0 %v836
      %854 = vmatprep.subr.bf16.mxu0 0
      %855 = vmatpush1.bf16.msra.mxu0 %v837
      %856 = vmatprep.subr.bf16.mxu0 0
      %857 = vmatpush1.bf16.msra.mxu0 %v838
      %858 = vmatprep.subr.bf16.mxu0 0
      %859 = vmatpush1.bf16.msra.mxu0 %v839
      %860 = vmatprep.subr.bf16.mxu0 0
      %861 = vmatpush1.bf16.msra.mxu0 %v840
      %862 = vmatprep.subr.bf16.mxu0 0
      %863 = vmatpush1.bf16.msra.mxu0 %v841
      %864 = vmatprep.subr.bf16.mxu0 0
      %865 = vmatpush1.bf16.msra.mxu0 %v842
      %866 = vmatprep.subr.bf16.mxu0 0
      %867 = vmatpush1.bf16.msra.mxu0 %v843
      %868 = vmatprep.subr.bf16.mxu0 0
      %869 = vmatpush1.bf16.msra.mxu0 0
      %870 = vmatprep.subr.bf16.mxu0 0
      %871 = vmatpush1.bf16.msra.mxu0 0
      %872 = vmatprep.subr.bf16.mxu0 0
      %873 = vmatpush1.bf16.msra.mxu0 0
      %874 = vmatprep.subr.bf16.mxu0 0
      %875 = vmatpush1.bf16.msra.mxu0 0
      %876 = vmatprep.subr.bf16.mxu0 0
      %877 = vmatpush1.bf16.msra.mxu0 0
      %878 = vmatprep.subr.bf16.mxu0 0
      %879 = vmatpush1.bf16.msra.mxu0 0
      %880 = vmatprep.subr.bf16.mxu0 0
      %881 = vmatpush1.bf16.msra.mxu0 0
      %882 = vmatprep.subr.bf16.mxu0 0
      %883 = vmatpush1.bf16.msra.mxu0 0
      %884 = vmatprep.mubr.bf16.mxu0 0
      %885 = vmatmul.mubr.bf16.gmra.mrb[0].mxu0 %v771
      %v886 = vpop.f32.mrb[0].mxu0
      %v887 = vadd.f32 %v802, %v886
      %v888 = vpop.f32.mrb[0].mxu0
      %v889 = vpop.f32.mrb[0].mxu0
      %v890 = vadd.f32 %v802, %v889
      %v891 = vpop.f32.mrb[0].mxu0
      %892 = vmatprep.mubr.bf16.mxu0 0
      %893 = vmatmul.mubr.bf16.gmra.mrb[0].mxu0 %v772
      %v894 = vpop.f32.mrb[0].mxu0
      %v895 = vadd.f32 %v802, %v894
      %v896 = vpop.f32.mrb[0].mxu0
      %v897 = vpop.f32.mrb[0].mxu0
      %v898 = vadd.f32 %v802, %v897
      %v899 = vpop.f32.mrb[0].mxu0
      %900 = vmatprep.mubr.bf16.mxu0 0
      %901 = vmatmul.mubr.bf16.gmra.mrb[0].mxu0 %v773
      %v902 = vpop.f32.mrb[0].mxu0
      %v903 = vadd.f32 %v802, %v902
      %v904 = vpop.f32.mrb[0].mxu0
      %v905 = vpop.f32.mrb[0].mxu0
      %v906 = vadd.f32 %v802, %v905
      %v907 = vpop.f32.mrb[0].mxu0
      %908 = vmatprep.mubr.bf16.mxu0 0
      %909 = vmatmul.mubr.bf16.gmra.mrb[0].mxu0 %v774
      %v910 = vpop.f32.mrb[0].mxu0
      %v911 = vadd.f32 %v802, %v910
      %v912 = vpop.f32.mrb[0].mxu0
      %v913 = vpop.f32.mrb[0].mxu0
      %v914 = vadd.f32 %v802, %v913
      %v915 = vpop.f32.mrb[0].mxu0
      %916 = vmatprep.mubr.bf16.mxu0 0
      %917 = vmatmul.mubr.bf16.gmra.mrb[0].mxu0 %v775
      %v918 = vpop.f32.mrb[0].mxu0
      %v919 = vadd.f32 %v802, %v918
      %v920 = vpop.f32.mrb[0].mxu0
      %v921 = vpop.f32.mrb[0].mxu0
      %v922 = vadd.f32 %v802, %v921
      %v923 = vpop.f32.mrb[0].mxu0
      %924 = vmatprep.mubr.bf16.mxu0 0
      %925 = vmatmul.mubr.bf16.gmra.mrb[0].mxu0 %v776
      %v926 = vpop.f32.mrb[0].mxu0
      %v927 = vadd.f32 %v802, %v926
      %v928 = vpop.f32.mrb[0].mxu0
      %v929 = vpop.f32.mrb[0].mxu0
      %v930 = vadd.f32 %v802, %v929
      %v931 = vpop.f32.mrb[0].mxu0
      %932 = vmatprep.mubr.bf16.mxu0 0
      %933 = vmatmul.mubr.bf16.gmra.mrb[0].mxu0 %v777
      %v934 = vpop.f32.mrb[0].mxu0
      %v935 = vadd.f32 %v802, %v934
      %v936 = vpop.f32.mrb[0].mxu0
      %v937 = vpop.f32.mrb[0].mxu0
      %v938 = vadd.f32 %v802, %v937
      %v939 = vpop.f32.mrb[0].mxu0
      %940 = vmatprep.mubr.bf16.mxu0 0
      %941 = vmatmul.mubr.bf16.gmra.mrb[0].mxu0 %v778
      %v942 = vpop.f32.mrb[0].mxu0
      %v943 = vadd.f32 %v802, %v942
      %v944 = vpop.f32.mrb[0].mxu0
      %v945 = vpop.f32.mrb[0].mxu0
      %v946 = vadd.f32 %v802, %v945
      %v947 = vpop.f32.mrb[0].mxu0
      %948 = vdwg.mxu0
      %v949 = vmax.f32 %v887, 0.0
      %v950 = vmax.f32 %v890, 0.0
      %v951 = vmax.f32 %v895, 0.0
      %v952 = vmax.f32 %v898, 0.0
      %v953 = vmax.f32 %v903, 0.0
      %v954 = vmax.f32 %v906, 0.0
      %v955 = vmax.f32 %v911, 0.0
      %v956 = vmax.f32 %v914, 0.0
      %v957 = vmax.f32 %v919, 0.0
      %v958 = vmax.f32 %v922, 0.0
      %v959 = vmax.f32 %v927, 0.0
      %v960 = vmax.f32 %v930, 0.0
      %v961 = vmax.f32 %v935, 0.0
      %v962 = vmax.f32 %v938, 0.0
      %v963 = vmax.f32 %v943, 0.0
      %v964 = vmax.f32 %v946, 0.0
      %v965 = vpack.c.bf16 %v950, %v949
      %v966 = vpack.c.bf16 %v952, %v951
      %v967 = vpack.c.bf16 %v954, %v953
      %v968 = vpack.c.bf16 %v956, %v955
      %v969 = vpack.c.bf16 %v958, %v957
      %v970 = vpack.c.bf16 %v960, %v959
      %v971 = vpack.c.bf16 %v962, %v961
      %v972 = vpack.c.bf16 %v964, %v963
      %s973 = scalar_lea.vmem %s1, 256
      %v974 = vld [vmem:[%s973] sm:$0xf]
      %v975 = vld [vmem:[%s973 + $0x4] sm:$0xf]
      %v976 = vld [vmem:[%s973 + $0x8] sm:$0xf]
      %v977 = vld [vmem:[%s973 + $0xc] sm:$0xf]
      %v978 = vld [vmem:[%s973 + $0x10] sm:$0xf]
      %v979 = vld [vmem:[%s973 + $0x14] sm:$0xf]
      %v980 = vld [vmem:[%s973 + $0x18] sm:$0xf]
      %v981 = vld [vmem:[%s973 + $0x1c] sm:$0xf]
      %v982 = vld [vmem:[%s973 + $0x20] sm:$0xf]
      %v983 = vld [vmem:[%s973 + $0x24] sm:$0xf]
      %v984 = vld [vmem:[%s973 + $0x28] sm:$0xf]
      %v985 = vld [vmem:[%s973 + $0x2c] sm:$0xf]
      %v986 = vld [vmem:[%s973 + $0x30] sm:$0xf]
      %v987 = vld [vmem:[%s973 + $0x34] sm:$0xf]
      %v988 = vld [vmem:[%s973 + $0x38] sm:$0xf]
      %v989 = vld [vmem:[%s973 + $0x3c] sm:$0xf]
      %s990 = scalar_lea.vmem %s2, 4
      %v991 = vld [vmem:[%s990] sm:$0x1]
      %v993 = vlaneseq
      %v994 = vshrl.u32 %v993, 7
      %v995 = vsub.s32 0, %v994
      %v996 = vrot.slane %v991, %v995
      %v1014 = vunpack.c.l.b16 %v974
      %v1015 = vunpack.c.l.b16 %v975
      %v1016 = vunpack.c.l.b16 %v976
      %v1017 = vunpack.c.l.b16 %v977
      %v1018 = vunpack.c.l.b16 %v978
      %v1019 = vunpack.c.l.b16 %v979
      %v1020 = vunpack.c.l.b16 %v980
      %v1021 = vunpack.c.l.b16 %v981
      %v1022 = vunpack.c.l.b16 %v982
      %v1023 = vunpack.c.l.b16 %v983
      %v1024 = vunpack.c.l.b16 %v984
      %v1025 = vunpack.c.l.b16 %v985
      %v1026 = vunpack.c.l.b16 %v986
      %v1027 = vunpack.c.l.b16 %v987
      %v1028 = vunpack.c.l.b16 %v988
      %v1029 = vunpack.c.l.b16 %v989
      %v1030 = vpack.c.b16 %v1015, %v1014
      %v1031 = vpack.c.b16 %v1017, %v1016
      %v1032 = vpack.c.b16 %v1019, %v1018
      %v1033 = vpack.c.b16 %v1021, %v1020
      %v1034 = vpack.c.b16 %v1023, %v1022
      %v1035 = vpack.c.b16 %v1025, %v1024
      %v1036 = vpack.c.b16 %v1027, %v1026
      %v1037 = vpack.c.b16 %v1029, %v1028
      %1046 = vmatprep.subr.bf16.mxu0 0
      %1047 = vmatpush1.bf16.msra.mxu0 %v1030
      %1048 = vmatprep.subr.bf16.mxu0 0
      %1049 = vmatpush1.bf16.msra.mxu0 %v1031
      %1050 = vmatprep.subr.bf16.mxu0 0
      %1051 = vmatpush1.bf16.msra.mxu0 %v1032
      %1052 = vmatprep.subr.bf16.mxu0 0
      %1053 = vmatpush1.bf16.msra.mxu0 %v1033
      %1054 = vmatprep.subr.bf16.mxu0 0
      %1055 = vmatpush1.bf16.msra.mxu0 %v1034
      %1056 = vmatprep.subr.bf16.mxu0 0
      %1057 = vmatpush1.bf16.msra.mxu0 %v1035
      %1058 = vmatprep.subr.bf16.mxu0 0
      %1059 = vmatpush1.bf16.msra.mxu0 %v1036
      %1060 = vmatprep.subr.bf16.mxu0 0
      %1061 = vmatpush1.bf16.msra.mxu0 %v1037
      %1062 = vmatprep.subr.bf16.mxu0 0
      %1063 = vmatpush1.bf16.msra.mxu0 0
      %1064 = vmatprep.subr.bf16.mxu0 0
      %1065 = vmatpush1.bf16.msra.mxu0 0
      %1066 = vmatprep.subr.bf16.mxu0 0
      %1067 = vmatpush1.bf16.msra.mxu0 0
      %1068 = vmatprep.subr.bf16.mxu0 0
      %1069 = vmatpush1.bf16.msra.mxu0 0
      %1070 = vmatprep.subr.bf16.mxu0 0
      %1071 = vmatpush1.bf16.msra.mxu0 0
      %1072 = vmatprep.subr.bf16.mxu0 0
      %1073 = vmatpush1.bf16.msra.mxu0 0
      %1074 = vmatprep.subr.bf16.mxu0 0
      %1075 = vmatpush1.bf16.msra.mxu0 0
      %1076 = vmatprep.subr.bf16.mxu0 0
      %1077 = vmatpush1.bf16.msra.mxu0 0
      %1078 = vmatprep.mubr.bf16.mxu0 0
      %1079 = vmatmul.mubr.bf16.gmra.mrb[0].mxu0 %v965
      %v1080 = vpop.f32.mrb[0].mxu0
      %v1081 = vadd.f32 %v996, %v1080
      %v1082 = vpop.f32.mrb[0].mxu0
      %v1083 = vpop.f32.mrb[0].mxu0
      %v1084 = vadd.f32 %v996, %v1083
      %v1085 = vpop.f32.mrb[0].mxu0
      %1086 = vmatprep.mubr.bf16.mxu0 0
      %1087 = vmatmul.mubr.bf16.gmra.mrb[0].mxu0 %v966
      %v1088 = vpop.f32.mrb[0].mxu0
      %v1089 = vadd.f32 %v996, %v1088
      %v1090 = vpop.f32.mrb[0].mxu0
      %v1091 = vpop.f32.mrb[0].mxu0
      %v1092 = vadd.f32 %v996, %v1091
      %v1093 = vpop.f32.mrb[0].mxu0
      %1094 = vmatprep.mubr.bf16.mxu0 0
      %1095 = vmatmul.mubr.bf16.gmra.mrb[0].mxu0 %v967
      %v1096 = vpop.f32.mrb[0].mxu0
      %v1097 = vadd.f32 %v996, %v1096
      %v1098 = vpop.f32.mrb[0].mxu0
      %v1099 = vpop.f32.mrb[0].mxu0
      %v1100 = vadd.f32 %v996, %v1099
      %v1101 = vpop.f32.mrb[0].mxu0
      %1102 = vmatprep.mubr.bf16.mxu0 0
      %1103 = vmatmul.mubr.bf16.gmra.mrb[0].mxu0 %v968
      %v1104 = vpop.f32.mrb[0].mxu0
      %v1105 = vadd.f32 %v996, %v1104
      %v1106 = vpop.f32.mrb[0].mxu0
      %v1107 = vpop.f32.mrb[0].mxu0
      %v1108 = vadd.f32 %v996, %v1107
      %v1109 = vpop.f32.mrb[0].mxu0
      %1110 = vmatprep.mubr.bf16.mxu0 0
      %1111 = vmatmul.mubr.bf16.gmra.mrb[0].mxu0 %v969
      %v1112 = vpop.f32.mrb[0].mxu0
      %v1113 = vadd.f32 %v996, %v1112
      %v1114 = vpop.f32.mrb[0].mxu0
      %v1115 = vpop.f32.mrb[0].mxu0
      %v1116 = vadd.f32 %v996, %v1115
      %v1117 = vpop.f32.mrb[0].mxu0
      %1118 = vmatprep.mubr.bf16.mxu0 0
      %1119 = vmatmul.mubr.bf16.gmra.mrb[0].mxu0 %v970
      %v1120 = vpop.f32.mrb[0].mxu0
      %v1121 = vadd.f32 %v996, %v1120
      %v1122 = vpop.f32.mrb[0].mxu0
      %v1123 = vpop.f32.mrb[0].mxu0
      %v1124 = vadd.f32 %v996, %v1123
      %v1125 = vpop.f32.mrb[0].mxu0
      %1126 = vmatprep.mubr.bf16.mxu0 0
      %1127 = vmatmul.mubr.bf16.gmra.mrb[0].mxu0 %v971
      %v1128 = vpop.f32.mrb[0].mxu0
      %v1129 = vadd.f32 %v996, %v1128
      %v1130 = vpop.f32.mrb[0].mxu0
      %v1131 = vpop.f32.mrb[0].mxu0
      %v1132 = vadd.f32 %v996, %v1131
      %v1133 = vpop.f32.mrb[0].mxu0
      %1134 = vmatprep.mubr.bf16.mxu0 0
      %1135 = vmatmul.mubr.bf16.gmra.mrb[0].mxu0 %v972
      %v1136 = vpop.f32.mrb[0].mxu0
      %v1137 = vadd.f32 %v996, %v1136
      %v1138 = vpop.f32.mrb[0].mxu0
      %v1139 = vpop.f32.mrb[0].mxu0
      %v1140 = vadd.f32 %v996, %v1139
      %v1141 = vpop.f32.mrb[0].mxu0
      %1142 = vdwg.mxu0
      %v1143 = vmax.f32 %v1081, 0.0
      %v1144 = vmax.f32 %v1084, 0.0
      %v1145 = vmax.f32 %v1089, 0.0
      %v1146 = vmax.f32 %v1092, 0.0
      %v1147 = vmax.f32 %v1097, 0.0
      %v1148 = vmax.f32 %v1100, 0.0
      %v1149 = vmax.f32 %v1105, 0.0
      %v1150 = vmax.f32 %v1108, 0.0
      %v1151 = vmax.f32 %v1113, 0.0
      %v1152 = vmax.f32 %v1116, 0.0
      %v1153 = vmax.f32 %v1121, 0.0
      %v1154 = vmax.f32 %v1124, 0.0
      %v1155 = vmax.f32 %v1129, 0.0
      %v1156 = vmax.f32 %v1132, 0.0
      %v1157 = vmax.f32 %v1137, 0.0
      %v1158 = vmax.f32 %v1140, 0.0
      %v1159 = vpack.c.bf16 %v1144, %v1143
      %v1160 = vpack.c.bf16 %v1146, %v1145
      %v1161 = vpack.c.bf16 %v1148, %v1147
      %v1162 = vpack.c.bf16 %v1150, %v1149
      %v1163 = vpack.c.bf16 %v1152, %v1151
      %v1164 = vpack.c.bf16 %v1154, %v1153
      %v1165 = vpack.c.bf16 %v1156, %v1155
      %v1166 = vpack.c.bf16 %v1158, %v1157
      %s1167 = scalar_lea.vmem %s1, 320
      %v1168 = vld [vmem:[%s1167] sm:$0xf]
      %v1169 = vld [vmem:[%s1167 + $0x4] sm:$0xf]
      %v1170 = vld [vmem:[%s1167 + $0x8] sm:$0xf]
      %v1171 = vld [vmem:[%s1167 + $0xc] sm:$0xf]
      %v1172 = vld [vmem:[%s1167 + $0x10] sm:$0xf]
      %v1173 = vld [vmem:[%s1167 + $0x14] sm:$0xf]
      %v1174 = vld [vmem:[%s1167 + $0x18] sm:$0xf]
      %v1175 = vld [vmem:[%s1167 + $0x1c] sm:$0xf]
      %v1176 = vld [vmem:[%s1167 + $0x20] sm:$0xf]
      %v1177 = vld [vmem:[%s1167 + $0x24] sm:$0xf]
      %v1178 = vld [vmem:[%s1167 + $0x28] sm:$0xf]
      %v1179 = vld [vmem:[%s1167 + $0x2c] sm:$0xf]
      %v1180 = vld [vmem:[%s1167 + $0x30] sm:$0xf]
      %v1181 = vld [vmem:[%s1167 + $0x34] sm:$0xf]
      %v1182 = vld [vmem:[%s1167 + $0x38] sm:$0xf]
      %v1183 = vld [vmem:[%s1167 + $0x3c] sm:$0xf]
      %s1184 = scalar_lea.vmem %s2, 5
      %v1185 = vld [vmem:[%s1184] sm:$0x1]
      %v1187 = vlaneseq
      %v1188 = vshrl.u32 %v1187, 7
      %v1189 = vsub.s32 0, %v1188
      %v1190 = vrot.slane %v1185, %v1189
      %v1208 = vunpack.c.l.b16 %v1168
      %v1209 = vunpack.c.l.b16 %v1169
      %v1210 = vunpack.c.l.b16 %v1170
      %v1211 = vunpack.c.l.b16 %v1171
      %v1212 = vunpack.c.l.b16 %v1172
      %v1213 = vunpack.c.l.b16 %v1173
      %v1214 = vunpack.c.l.b16 %v1174
      %v1215 = vunpack.c.l.b16 %v1175
      %v1216 = vunpack.c.l.b16 %v1176
      %v1217 = vunpack.c.l.b16 %v1177
      %v1218 = vunpack.c.l.b16 %v1178
      %v1219 = vunpack.c.l.b16 %v1179
      %v1220 = vunpack.c.l.b16 %v1180
      %v1221 = vunpack.c.l.b16 %v1181
      %v1222 = vunpack.c.l.b16 %v1182
      %v1223 = vunpack.c.l.b16 %v1183
      %v1224 = vpack.c.b16 %v1209, %v1208
      %v1225 = vpack.c.b16 %v1211, %v1210
      %v1226 = vpack.c.b16 %v1213, %v1212
      %v1227 = vpack.c.b16 %v1215, %v1214
      %v1228 = vpack.c.b16 %v1217, %v1216
      %v1229 = vpack.c.b16 %v1219, %v1218
      %v1230 = vpack.c.b16 %v1221, %v1220
      %v1231 = vpack.c.b16 %v1223, %v1222
      %1240 = vmatprep.subr.bf16.mxu0 0
      %1241 = vmatpush1.bf16.msra.mxu0 %v1224
      %1242 = vmatprep.subr.bf16.mxu0 0
      %1243 = vmatpush1.bf16.msra.mxu0 %v1225
      %1244 = vmatprep.subr.bf16.mxu0 0
      %1245 = vmatpush1.bf16.msra.mxu0 %v1226
      %1246 = vmatprep.subr.bf16.mxu0 0
      %1247 = vmatpush1.bf16.msra.mxu0 %v1227
      %1248 = vmatprep.subr.bf16.mxu0 0
      %1249 = vmatpush1.bf16.msra.mxu0 %v1228
      %1250 = vmatprep.subr.bf16.mxu0 0
      %1251 = vmatpush1.bf16.msra.mxu0 %v1229
      %1252 = vmatprep.subr.bf16.mxu0 0
      %1253 = vmatpush1.bf16.msra.mxu0 %v1230
      %1254 = vmatprep.subr.bf16.mxu0 0
      %1255 = vmatpush1.bf16.msra.mxu0 %v1231
      %1256 = vmatprep.subr.bf16.mxu0 0
      %1257 = vmatpush1.bf16.msra.mxu0 0
      %1258 = vmatprep.subr.bf16.mxu0 0
      %1259 = vmatpush1.bf16.msra.mxu0 0
      %1260 = vmatprep.subr.bf16.mxu0 0
      %1261 = vmatpush1.bf16.msra.mxu0 0
      %1262 = vmatprep.subr.bf16.mxu0 0
      %1263 = vmatpush1.bf16.msra.mxu0 0
      %1264 = vmatprep.subr.bf16.mxu0 0
      %1265 = vmatpush1.bf16.msra.mxu0 0
      %1266 = vmatprep.subr.bf16.mxu0 0
      %1267 = vmatpush1.bf16.msra.mxu0 0
      %1268 = vmatprep.subr.bf16.mxu0 0
      %1269 = vmatpush1.bf16.msra.mxu0 0
      %1270 = vmatprep.subr.bf16.mxu0 0
      %1271 = vmatpush1.bf16.msra.mxu0 0
      %1272 = vmatprep.mubr.bf16.mxu0 0
      %1273 = vmatmul.mubr.bf16.gmra.mrb[0].mxu0 %v1159
      %v1274 = vpop.f32.mrb[0].mxu0
      %v1275 = vadd.f32 %v1190, %v1274
      %v1276 = vpop.f32.mrb[0].mxu0
      %v1277 = vpop.f32.mrb[0].mxu0
      %v1278 = vadd.f32 %v1190, %v1277
      %v1279 = vpop.f32.mrb[0].mxu0
      %1280 = vmatprep.mubr.bf16.mxu0 0
      %1281 = vmatmul.mubr.bf16.gmra.mrb[0].mxu0 %v1160
      %v1282 = vpop.f32.mrb[0].mxu0
      %v1283 = vadd.f32 %v1190, %v1282
      %v1284 = vpop.f32.mrb[0].mxu0
      %v1285 = vpop.f32.mrb[0].mxu0
      %v1286 = vadd.f32 %v1190, %v1285
      %v1287 = vpop.f32.mrb[0].mxu0
      %1288 = vmatprep.mubr.bf16.mxu0 0
      %1289 = vmatmul.mubr.bf16.gmra.mrb[0].mxu0 %v1161
      %v1290 = vpop.f32.mrb[0].mxu0
      %v1291 = vadd.f32 %v1190, %v1290
      %v1292 = vpop.f32.mrb[0].mxu0
      %v1293 = vpop.f32.mrb[0].mxu0
      %v1294 = vadd.f32 %v1190, %v1293
      %v1295 = vpop.f32.mrb[0].mxu0
      %1296 = vmatprep.mubr.bf16.mxu0 0
      %1297 = vmatmul.mubr.bf16.gmra.mrb[0].mxu0 %v1162
      %v1298 = vpop.f32.mrb[0].mxu0
      %v1299 = vadd.f32 %v1190, %v1298
      %v1300 = vpop.f32.mrb[0].mxu0
      %v1301 = vpop.f32.mrb[0].mxu0
      %v1302 = vadd.f32 %v1190, %v1301
      %v1303 = vpop.f32.mrb[0].mxu0
      %1304 = vmatprep.mubr.bf16.mxu0 0
      %1305 = vmatmul.mubr.bf16.gmra.mrb[0].mxu0 %v1163
      %v1306 = vpop.f32.mrb[0].mxu0
      %v1307 = vadd.f32 %v1190, %v1306
      %v1308 = vpop.f32.mrb[0].mxu0
      %v1309 = vpop.f32.mrb[0].mxu0
      %v1310 = vadd.f32 %v1190, %v1309
      %v1311 = vpop.f32.mrb[0].mxu0
      %1312 = vmatprep.mubr.bf16.mxu0 0
      %1313 = vmatmul.mubr.bf16.gmra.mrb[0].mxu0 %v1164
      %v1314 = vpop.f32.mrb[0].mxu0
      %v1315 = vadd.f32 %v1190, %v1314
      %v1316 = vpop.f32.mrb[0].mxu0
      %v1317 = vpop.f32.mrb[0].mxu0
      %v1318 = vadd.f32 %v1190, %v1317
      %v1319 = vpop.f32.mrb[0].mxu0
      %1320 = vmatprep.mubr.bf16.mxu0 0
      %1321 = vmatmul.mubr.bf16.gmra.mrb[0].mxu0 %v1165
      %v1322 = vpop.f32.mrb[0].mxu0
      %v1323 = vadd.f32 %v1190, %v1322
      %v1324 = vpop.f32.mrb[0].mxu0
      %v1325 = vpop.f32.mrb[0].mxu0
      %v1326 = vadd.f32 %v1190, %v1325
      %v1327 = vpop.f32.mrb[0].mxu0
      %1328 = vmatprep.mubr.bf16.mxu0 0
      %1329 = vmatmul.mubr.bf16.gmra.mrb[0].mxu0 %v1166
      %v1330 = vpop.f32.mrb[0].mxu0
      %v1331 = vadd.f32 %v1190, %v1330
      %v1332 = vpop.f32.mrb[0].mxu0
      %v1333 = vpop.f32.mrb[0].mxu0
      %v1334 = vadd.f32 %v1190, %v1333
      %v1335 = vpop.f32.mrb[0].mxu0
      %1336 = vdwg.mxu0
      %1337 = vst [vmem:[%s172] sm:$0xff] %v1275
      %1338 = vst [vmem:[%s172 + $0x8] sm:$0xff] %v1278
      %1339 = vst [vmem:[%s172 + $0x10] sm:$0xff] %v1283
      %1340 = vst [vmem:[%s172 + $0x18] sm:$0xff] %v1286
      %1341 = vst [vmem:[%s172 + $0x20] sm:$0xff] %v1291
      %1342 = vst [vmem:[%s172 + $0x28] sm:$0xff] %v1294
      %1343 = vst [vmem:[%s172 + $0x30] sm:$0xff] %v1299
      %1344 = vst [vmem:[%s172 + $0x38] sm:$0xff] %v1302
      %1345 = vst [vmem:[%s172 + $0x40] sm:$0xff] %v1307
      %1346 = vst [vmem:[%s172 + $0x48] sm:$0xff] %v1310
      %1347 = vst [vmem:[%s172 + $0x50] sm:$0xff] %v1315
      %1348 = vst [vmem:[%s172 + $0x58] sm:$0xff] %v1318
      %1349 = vst [vmem:[%s172 + $0x60] sm:$0xff] %v1323
      %1350 = vst [vmem:[%s172 + $0x68] sm:$0xff] %v1326
      %1351 = vst [vmem:[%s172 + $0x70] sm:$0xff] %v1331
      %1352 = vst [vmem:[%s172 + $0x78] sm:$0xff] %v1334
      %s1353 = smul.u32 16, %s14
      %p1354 = scmp.lt.s32.totalorder %s1353, 31
      %s1355 = scalar_select %p1354, %s1353, 31
      %s1356 = smul.addr %s1355, 8
      %s1357 = scalar_lea.vmem %s3, %s1356
      // Predicated region
      $region33: #{net_forward.1} parent=31 // pred_check
        %p1358 = pneg %p100
      $region34: #{net_forward.1} parent=31 // pred_check_branch
        %1360 = sbr.rel (%p1358) target = $region36
      $region35: #{net_forward.1} parent=31 // pred_region
        %s1361 = smul.u32 16, %s14
      $region36: #{net_forward.1} parent=31 // pred_fallthru
        _
    $region32: #{net_forward.1} parent=5 // pred_fallthru
      _
    %p1362 = scmp.le.s32.totalorder 2, %s9
    // Predicated region
    $region37: #{net_forward.1} parent=5 // pred_check
      %p1363 = pneg %p1362
    $region38: #{net_forward.1} parent=5 // pred_check_branch
      %1365 = sbr.rel (%p1363) target = $region40
    $region39: #{net_forward.1} parent=5 // pred_region
      %s1366 = ssub.s32 %s9, 2
      // Predicated region
      $region41: #{net_forward.1} parent=39 // pred_check
        %p1367 = pneg %p106
      $region42: #{net_forward.1} parent=39 // pred_check_branch
        %1369 = sbr.rel (%p1367) target = $region44
      $region43: #{net_forward.1} parent=39 // pred_region
        %s1370 = smul.u32 16, %s15
        %p1371 = scmp.lt.s32.totalorder %s1370, 31
        %s1372 = scalar_select %p1371, %s1370, 31
        %s1373 = smul.addr %s1372, 8
        %s1374 = scalar_lea.vmem %s3, %s1373
      $region44: #{net_forward.1} parent=39 // pred_fallthru
        _
    $region40: #{net_forward.1} parent=5 // pred_fallthru
      _
  $region6: #{net_forward.1} parent=0 // loop_footer
    %s13 = sadd.s32 1, %s9
  $region7: #{net_forward.1} parent=0 // loop_footer_branch
    %8 = sbr.rel target = $region3
  $region8: #{net_forward.1} parent=0 // loop_exit
    _

</llo_original>
